<compile_context>
chip_gen: v5e
topology: v5e:2x2
jax: 0.10.0
libtpu: 0.0.40
codegen_flags: <defaults>
</compile_context>

<pallas_src>
import jax
import jax.numpy as jnp
from jax.experimental import pallas as pl
from jax.experimental.pallas import tpu as pltpu

# ---- fixed (deterministic) dynamics parameters, matching the module's __init__ ----
DT = 0.05          # self.dt
G = 9.81           # self.g
GEAR = 40.0        # self.gear
VLIM = 20.0        # self.vlim
ROB_MASS = 1.5     # self.rob_mass_def


def _round_up(x: int, m: int) -> int:
    return ((x + m - 1) // m) * m


def _ball_dynamics_kernel(state_ref, action_ref, out_ref):
    # state_ref: (6, TB), action_ref: (1, TB), out_ref: (6, TB)  -- batch on lanes.
    x_rob     = state_ref[0:1, :]
    x_rob_dot = state_ref[1:2, :]
    xball     = state_ref[2:3, :]
    yball     = state_ref[3:4, :]
    vx_ball   = state_ref[4:5, :]
    vy_ball   = state_ref[5:6, :]
    a         = action_ref[...]          # (1, TB)

    # force on point robot (clamped action * gear)
    force = GEAR * jnp.clip(a, -1.0, 1.0)
    # NB: the reference code divides mass by force (reproduced verbatim).
    # Exact division kept for bit-parity with the reference; compute is not the
    # bottleneck here (pure HBM-bandwidth kernel).
    robot_acc = ROB_MASS / force

    # propagate velocities: v' = v + a * dt   (ball_xacc == 0 -> pass-through)
    new_vxball = vx_ball
    new_vyball = vy_ball + (-G) * DT
    new_v_rob  = x_rob_dot + robot_acc * DT

    # propagate positions with trapezoidal velocity: x' = x + 0.5*(v + v')*dt
    new_xball = xball + 0.5 * (vx_ball + new_vxball) * DT
    new_yball = yball + 0.5 * (vy_ball + new_vyball) * DT
    new_x_rob = x_rob + 0.5 * (x_rob_dot + new_v_rob) * DT

    # row-by-row, lane-dense stores (velocity limits applied on the way out)
    out_ref[0:1, :] = new_x_rob
    out_ref[1:2, :] = jnp.clip(new_v_rob, -VLIM, VLIM)
    out_ref[2:3, :] = new_xball
    out_ref[3:4, :] = new_yball
    out_ref[4:5, :] = jnp.clip(new_vxball, -VLIM, VLIM)
    out_ref[5:6, :] = jnp.clip(new_vyball, -VLIM, VLIM)


def ball_dynamics(state: jax.Array, action: jax.Array, *, lane_tile: int = 4096) -> jax.Array:
    """state: (B, 6) float32, action: (B, 1) float32 -> next_state: (B, 6) float32.

    lane_tile: batch elements per grid step (multiple of 128); sized so that
    double-buffered (state, action, out) tiles stay far below scoped VMEM on
    v5e/v6e/v7x while keeping per-grid-step overhead amortized.
    """
    B, nx = state.shape
    assert nx == 6
    assert action.shape == (B, 1)
    dtype = state.dtype

    # Lane-dense layout: batch on the last (lane) dim.
    state_t = state.T        # (6, B)
    action_t = action.T      # (1, B)

    # Pad batch to a multiple of the lane tile (tile itself a multiple of 128).
    tb = min(_round_up(max(lane_tile, 128), 128), _round_up(B, 128))
    b_pad = _round_up(B, tb)
    if b_pad != B:
        state_t = jnp.pad(state_t, ((0, 0), (0, b_pad - B)))
        # pad action with 1.0 so the (discarded) padded lanes never divide by 0
        action_t = jnp.pad(action_t, ((0, 0), (0, b_pad - B)), constant_values=1.0)

    grid = (b_pad // tb,)
    out_t = pl.pallas_call(
        _ball_dynamics_kernel,
        out_shape=jax.ShapeDtypeStruct((6, b_pad), dtype),
        grid_spec=pltpu.PrefetchScalarGridSpec(
            num_scalar_prefetch=0,
            grid=grid,
            in_specs=[
                pl.BlockSpec((6, tb), lambda i: (0, i)),
                pl.BlockSpec((1, tb), lambda i: (0, i)),
            ],
            out_specs=pl.BlockSpec((6, tb), lambda i: (0, i)),
        ),
        compiler_params=pltpu.CompilerParams(
            dimension_semantics=("parallel",),
        ),
        # Reuse the (transposed) state buffer for the output: no extra HBM
        # allocation when the dynamics are stepped repeatedly.
        input_output_aliases={0: 0},
    )(state_t, action_t)

    return out_t[:, :B].T


def _reference(state, action):
    """Pure-JAX reference mirroring the PyTorch forward."""
    x_rob, x_rob_dot, xball, yball, vx, vy = [state[:, i:i + 1] for i in range(6)]
    force = GEAR * jnp.clip(action, -1.0, 1.0)
    robot_acc = ROB_MASS / force
    new_vx = vx + 0.0 * DT
    new_vy = vy + (-G) * DT
    new_vr = x_rob_dot + robot_acc * DT
    new_xb = xball + 0.5 * (vx + new_vx) * DT
    new_yb = yball + 0.5 * (vy + new_vy) * DT
    new_xr = x_rob + 0.5 * (x_rob_dot + new_vr) * DT
    new_vx = jnp.clip(new_vx, -VLIM, VLIM)
    new_vy = jnp.clip(new_vy, -VLIM, VLIM)
    new_vr = jnp.clip(new_vr, -VLIM, VLIM)
    return jnp.concatenate((new_xr, new_vr, new_xb, new_yb, new_vx, new_vy), axis=1)


if __name__ == "__main__":
    key = jax.random.PRNGKey(0)
    k_state, k_action, k_state2, k_action2 = jax.random.split(key, 4)

    # Small primary check (exercises the padding path: B=8 -> one 128-lane tile).
    B = 8
    state = jax.random.normal(k_state, (B, 6), dtype=jnp.float32)
    # keep actions away from 0 so mass/force stays finite (matches reference semantics)
    action = 0.5 + 0.5 * jax.random.uniform(k_action, (B, 1), dtype=jnp.float32)

    out = ball_dynamics(state, action)
    jax.block_until_ready(out)
    ref = _reference(state, action)
    assert out.shape == (B, 6)
    assert jnp.allclose(out, ref, atol=1e-5, rtol=1e-5)

    # Secondary check: non-multiple-of-128 batch with a multi-step grid
    # (lane_tile=128 -> grid of 3 tiles) to exercise tiling + padding together.
    B2 = 260
    state2 = jax.random.normal(k_state2, (B2, 6), dtype=jnp.float32)
    action2 = -(0.25 + 0.5 * jax.random.uniform(k_action2, (B2, 1), dtype=jnp.float32))
    out2 = ball_dynamics(state2, action2, lane_tile=128)
    jax.block_until_ready(out2)
    ref2 = _reference(state2, action2)
    assert out2.shape == (B2, 6)
    assert jnp.allclose(out2, ref2, atol=1e-5, rtol=1e-5)

    print("KERNEL_OK")
</pallas_src>

<mosaic_0001>
module attributes {stable_mosaic.version = 11 : i64} {
  func.func @_ball_dynamics_kernel(%arg0: i32, %arg1: memref<6x128xf32, #tpu.memory_space<vmem>>, %arg2: memref<1x128xf32, #tpu.memory_space<vmem>>, %arg3: memref<6x128xf32, #tpu.memory_space<vmem>>) attributes {dimension_semantics = [#tpu.dimension_semantics<parallel>], iteration_bounds = array<i64: 1>, scalar_prefetch = 0 : i64, scratch_operands = 0 : i64, tpu.core_type = #tpu.core_type<tc>, window_params = [{transform_indices = @transform_0, window_bounds = array<i64: 6, 128>}, {transform_indices = @transform_1, window_bounds = array<i64: 1, 128>}, {transform_indices = @transform_2, window_bounds = array<i64: 6, 128>}]} {
    %c0 = arith.constant 0 : index
    %c0_0 = arith.constant 0 : index
    %0 = vector.load %arg1[%c0, %c0_0] : memref<6x128xf32, #tpu.memory_space<vmem>>, vector<1x128xf32>
    %c1 = arith.constant 1 : index
    %c0_1 = arith.constant 0 : index
    %1 = vector.load %arg1[%c1, %c0_1] : memref<6x128xf32, #tpu.memory_space<vmem>>, vector<1x128xf32>
    %c2 = arith.constant 2 : index
    %c0_2 = arith.constant 0 : index
    %2 = vector.load %arg1[%c2, %c0_2] : memref<6x128xf32, #tpu.memory_space<vmem>>, vector<1x128xf32>
    %c3 = arith.constant 3 : index
    %c0_3 = arith.constant 0 : index
    %3 = vector.load %arg1[%c3, %c0_3] : memref<6x128xf32, #tpu.memory_space<vmem>>, vector<1x128xf32>
    %c4 = arith.constant 4 : index
    %c0_4 = arith.constant 0 : index
    %4 = vector.load %arg1[%c4, %c0_4] : memref<6x128xf32, #tpu.memory_space<vmem>>, vector<1x128xf32>
    %c5 = arith.constant 5 : index
    %c0_5 = arith.constant 0 : index
    %5 = vector.load %arg1[%c5, %c0_5] : memref<6x128xf32, #tpu.memory_space<vmem>>, vector<1x128xf32>
    %c0_6 = arith.constant 0 : index
    %c0_7 = arith.constant 0 : index
    %6 = vector.load %arg2[%c0_6, %c0_7] : memref<1x128xf32, #tpu.memory_space<vmem>>, vector<1x128xf32>
    %cst = arith.constant -1.000000e+00 : f32
    %cst_8 = arith.constant 1.000000e+00 : f32
    %7 = vector.broadcast %cst : f32 to vector<1x128xf32>
    %8 = arith.maximumf %7, %6 : vector<1x128xf32>
    %9 = vector.broadcast %cst_8 : f32 to vector<1x128xf32>
    %10 = arith.minimumf %9, %8 : vector<1x128xf32>
    %cst_9 = arith.constant 4.000000e+01 : f32
    %11 = vector.broadcast %cst_9 : f32 to vector<1x128xf32>
    %12 = arith.mulf %11, %10 : vector<1x128xf32>
    %cst_10 = arith.constant 1.500000e+00 : f32
    %13 = vector.broadcast %cst_10 : f32 to vector<1x128xf32>
    %14 = arith.divf %13, %12 : vector<1x128xf32>
    %cst_11 = arith.constant -4.905000e-01 : f32
    %15 = vector.broadcast %cst_11 : f32 to vector<1x128xf32>
    %16 = arith.addf %5, %15 : vector<1x128xf32>
    %cst_12 = arith.constant 5.000000e-02 : f32
    %17 = vector.broadcast %cst_12 : f32 to vector<1x128xf32>
    %18 = arith.mulf %14, %17 : vector<1x128xf32>
    %19 = arith.addf %1, %18 : vector<1x128xf32>
    %20 = arith.addf %4, %4 : vector<1x128xf32>
    %cst_13 = arith.constant 5.000000e-01 : f32
    %21 = vector.broadcast %cst_13 : f32 to vector<1x128xf32>
    %22 = arith.mulf %21, %20 : vector<1x128xf32>
    %cst_14 = arith.constant 5.000000e-02 : f32
    %23 = vector.broadcast %cst_14 : f32 to vector<1x128xf32>
    %24 = arith.mulf %22, %23 : vector<1x128xf32>
    %25 = arith.addf %2, %24 : vector<1x128xf32>
    %26 = arith.addf %5, %16 : vector<1x128xf32>
    %cst_15 = arith.constant 5.000000e-01 : f32
    %27 = vector.broadcast %cst_15 : f32 to vector<1x128xf32>
    %28 = arith.mulf %27, %26 : vector<1x128xf32>
    %cst_16 = arith.constant 5.000000e-02 : f32
    %29 = vector.broadcast %cst_16 : f32 to vector<1x128xf32>
    %30 = arith.mulf %28, %29 : vector<1x128xf32>
    %31 = arith.addf %3, %30 : vector<1x128xf32>
    %32 = arith.addf %1, %19 : vector<1x128xf32>
    %cst_17 = arith.constant 5.000000e-01 : f32
    %33 = vector.broadcast %cst_17 : f32 to vector<1x128xf32>
    %34 = arith.mulf %33, %32 : vector<1x128xf32>
    %cst_18 = arith.constant 5.000000e-02 : f32
    %35 = vector.broadcast %cst_18 : f32 to vector<1x128xf32>
    %36 = arith.mulf %34, %35 : vector<1x128xf32>
    %37 = arith.addf %0, %36 : vector<1x128xf32>
    %c0_19 = arith.constant 0 : index
    %c0_20 = arith.constant 0 : index
    %38 = vector.load %arg3[%c0_19, %c0_20] : memref<6x128xf32, #tpu.memory_space<vmem>>, vector<1x128xf32>
    tpu.vector_store %arg3[%c0_19, %c0_20], %37 {strides = array<i32>} : memref<6x128xf32, #tpu.memory_space<vmem>>, vector<1x128xf32>,
    %cst_21 = arith.constant -2.000000e+01 : f32
    %cst_22 = arith.constant 2.000000e+01 : f32
    %39 = vector.broadcast %cst_21 : f32 to vector<1x128xf32>
    %40 = arith.maximumf %39, %19 : vector<1x128xf32>
    %41 = vector.broadcast %cst_22 : f32 to vector<1x128xf32>
    %42 = arith.minimumf %41, %40 : vector<1x128xf32>
    %c1_23 = arith.constant 1 : index
    %c0_24 = arith.constant 0 : index
    %43 = vector.load %arg3[%c1_23, %c0_24] : memref<6x128xf32, #tpu.memory_space<vmem>>, vector<1x128xf32>
    tpu.vector_store %arg3[%c1_23, %c0_24], %42 {strides = array<i32>} : memref<6x128xf32, #tpu.memory_space<vmem>>, vector<1x128xf32>,
    %c2_25 = arith.constant 2 : index
    %c0_26 = arith.constant 0 : index
    %44 = vector.load %arg3[%c2_25, %c0_26] : memref<6x128xf32, #tpu.memory_space<vmem>>, vector<1x128xf32>
    tpu.vector_store %arg3[%c2_25, %c0_26], %25 {strides = array<i32>} : memref<6x128xf32, #tpu.memory_space<vmem>>, vector<1x128xf32>,
    %c3_27 = arith.constant 3 : index
    %c0_28 = arith.constant 0 : index
    %45 = vector.load %arg3[%c3_27, %c0_28] : memref<6x128xf32, #tpu.memory_space<vmem>>, vector<1x128xf32>
    tpu.vector_store %arg3[%c3_27, %c0_28], %31 {strides = array<i32>} : memref<6x128xf32, #tpu.memory_space<vmem>>, vector<1x128xf32>,
    %cst_29 = arith.constant -2.000000e+01 : f32
    %cst_30 = arith.constant 2.000000e+01 : f32
    %46 = vector.broadcast %cst_29 : f32 to vector<1x128xf32>
    %47 = arith.maximumf %46, %4 : vector<1x128xf32>
    %48 = vector.broadcast %cst_30 : f32 to vector<1x128xf32>
    %49 = arith.minimumf %48, %47 : vector<1x128xf32>
    %c4_31 = arith.constant 4 : index
    %c0_32 = arith.constant 0 : index
    %50 = vector.load %arg3[%c4_31, %c0_32] : memref<6x128xf32, #tpu.memory_space<vmem>>, vector<1x128xf32>
    tpu.vector_store %arg3[%c4_31, %c0_32], %49 {strides = array<i32>} : memref<6x128xf32, #tpu.memory_space<vmem>>, vector<1x128xf32>,
    %cst_33 = arith.constant -2.000000e+01 : f32
    %cst_34 = arith.constant 2.000000e+01 : f32
    %51 = vector.broadcast %cst_33 : f32 to vector<1x128xf32>
    %52 = arith.maximumf %51, %16 : vector<1x128xf32>
    %53 = vector.broadcast %cst_34 : f32 to vector<1x128xf32>
    %54 = arith.minimumf %53, %52 : vector<1x128xf32>
    %c5_35 = arith.constant 5 : index
    %c0_36 = arith.constant 0 : index
    %55 = vector.load %arg3[%c5_35, %c0_36] : memref<6x128xf32, #tpu.memory_space<vmem>>, vector<1x128xf32>
    tpu.vector_store %arg3[%c5_35, %c0_36], %54 {strides = array<i32>} : memref<6x128xf32, #tpu.memory_space<vmem>>, vector<1x128xf32>,
    return
  }
  func.func @transform_0(%arg0: i32) -> (i32, i32) {
    %c0_i32 = arith.constant 0 : i32
    %c0_i32_0 = arith.constant 0 : i32
    return %c0_i32, %arg0 : i32, i32
  }
  func.func @transform_1(%arg0: i32) -> (i32, i32) {
    %c0_i32 = arith.constant 0 : i32
    %c0_i32_0 = arith.constant 0 : i32
    return %c0_i32, %arg0 : i32, i32
  }
  func.func @transform_2(%arg0: i32) -> (i32, i32) {
    %c0_i32 = arith.constant 0 : i32
    %c0_i32_0 = arith.constant 0 : i32
    return %c0_i32, %arg0 : i32, i32
  }
}

</mosaic_0001>

<llo_original>
// kernel: tpu_custom_call.1
$region0: #{tpu_custom_call.1}
  #allocation0 [shape = 'u32[]', space=smem, size = 0x4, offset = 0x4, fixed_abs, tag = 'smem constant byte address 0x4 - core index']
  #allocation1 [shape = 'u32[72,128]{1,0:T(1,128)}', space=vmem, size = 0x9000, scoped, tag = 'internal scratch']
  %s0 = inlined_call_operand.hbm [shape: f32[6,128], index: 0, kind: input, shape index: {}, may-alias: {0,2}]
  %s1 = inlined_call_operand.vmem [shape: f32[1,128], index: 1, kind: input, shape index: {}]
  %s2 = inlined_call_operand.hbm [shape: f32[6,128], index: 2, kind: output, shape index: {}, may-alias: {0,2}]
  %s3 = sld [smem:[#allocation0]]
  $region22: #{tpu_custom_call.1} parent=0
    _
  %s5 = ssub.s32 1, %s3
  %s6 = scalar_select 0, %s5, %s3
  $region1: #{tpu_custom_call.1} parent=0
    #allocation2 [shape = 'u8[4096]{0}', space=vmem, size = 0x1000, scoped, tag = 'input window, operand 0, single buffered']
    #allocation3 [shape = 's32[1]{0}', space=sflag, size = 0x4, scoped, tag = 'scoped memory for tpu_custom_call.1']
    #allocation4 [shape = 's32[1]{0}', space=sflag, size = 0x4, scoped, tag = 'scoped memory for tpu_custom_call.1']
    #allocation5 [shape = 'u8[4096]{0}', space=vmem, size = 0x1000, scoped, tag = 'output window, operand 0, single buffered']
    %7 = vsyncpa [#allocation3], 0
    %8 = vsyncpa [#allocation4], 0
    // Predicated region
    $region2: #{tpu_custom_call.1} parent=1 // pred_check
      _
    $region3: #{tpu_custom_call.1} parent=1 // pred_check_branch
      %10 = sbr.rel (0) target = $region5
    $region4: #{tpu_custom_call.1} parent=1 // pred_region
      %12 = vsyncadd [#allocation3], 0
      %s14 = sshll.u32 %s0, 4
      %s15 = int_to_ptr.hbm [resolvable:$true] %s14
      %s16 = sshll.u32 [#allocation2], 4
      %s17 = int_to_ptr.vmem [resolvable:$true] %s16
      %19 = dma.hbm_to_vmem [thread:$0]  %s15, 128, %s17, [#allocation3]
    $region5: #{tpu_custom_call.1} parent=1 // pred_fallthru
      _
    // Predicated region
    $region6: #{tpu_custom_call.1} parent=1 // pred_check
      _
    $region7: #{tpu_custom_call.1} parent=1 // pred_check_branch
      %21 = sbr.rel (0) target = $region9
    $region8: #{tpu_custom_call.1} parent=1 // pred_region
      _
    $region9: #{tpu_custom_call.1} parent=1 // pred_fallthru
      _
    // Predicated region
    $region10: #{tpu_custom_call.1} parent=1 // pred_check
      _
    $region11: #{tpu_custom_call.1} parent=1 // pred_check_branch
      %23 = sbr.rel (0) target = $region13
    $region12: #{tpu_custom_call.1} parent=1 // pred_region
      %25 = dma.done [#allocation3], 128
    $region13: #{tpu_custom_call.1} parent=1 // pred_fallthru
      _
    %v26 = vld [vmem:[#allocation2] sm:$0x1]
    %v27 = vld [vmem:[#allocation2 + $0x1] sm:$0x1]
    %v28 = vld [vmem:[#allocation2 + $0x2] sm:$0x1]
    %v29 = vld [vmem:[#allocation2 + $0x3] sm:$0x1]
    %v30 = vld [vmem:[#allocation2 + $0x4] sm:$0x1]
    %v31 = vld [vmem:[#allocation2 + $0x5] sm:$0x1]
    %v32 = vld [vmem:[%s1] sm:$0x1]
    %v33 = vmax.f32 %v32, -1.0
    %v34 = vmin.f32 %v33, 1.0
    %v35 = vmul.f32 %v34, 40.0
    %v36 = vrcp.pop %v35
    %v37 = vmul.f32 %v35, %v36
    %v38 = vsub.f32 1.0, %v37
    %v39 = vmul.f32 %v36, %v38
    %v40 = vadd.f32 %v36, %v39
    %vm41 = vweird.f32 %v35
    %vm42 = vweird.f32 %v36
    %vm43 = vmor %vm41, %vm42
    %v44 = vsel %vm43, %v36, %v40
    %v45 = vand.u32 2147483647, %v35
    %vm46 = vcmp.eq.f32.partialorder %v45, 8.507059e+37
    %v47 = vand.u32 %v35, 2147483648
    %v48 = vor.u32 1.1754944e-38, %v47
    %v49 = vsel %vm46, %v48, %v44
    %v50 = vmul.f32 1.5, %v49
    %v51 = vadd.f32 %v31, -0.4905
    %v52 = vmul.f32 %v50, 0.05
    %v53 = vadd.f32 %v27, %v52
    %v54 = vadd.f32 %v30, %v30
    %v55 = vmul.f32 %v54, 0.5
    %v56 = vmul.f32 %v55, 0.05
    %v57 = vadd.f32 %v28, %v56
    %v58 = vadd.f32 %v31, %v51
    %v59 = vmul.f32 %v58, 0.5
    %v60 = vmul.f32 %v59, 0.05
    %v61 = vadd.f32 %v29, %v60
    %v62 = vadd.f32 %v27, %v53
    %v63 = vmul.f32 %v62, 0.5
    %v64 = vmul.f32 %v63, 0.05
    %v65 = vadd.f32 %v26, %v64
    %66 = vst [vmem:[#allocation5] sm:$0x1] %v65
    %v67 = vmax.f32 %v53, -20.0
    %v68 = vmin.f32 %v67, 20.0
    %69 = vst [vmem:[#allocation5 + $0x1] sm:$0x1] %v68
    %70 = vst [vmem:[#allocation5 + $0x2] sm:$0x1] %v57
    %71 = vst [vmem:[#allocation5 + $0x3] sm:$0x1] %v61
    %v72 = vmax.f32 %v30, -20.0
    %v73 = vmin.f32 %v72, 20.0
    %74 = vst [vmem:[#allocation5 + $0x4] sm:$0x1] %v73
    %v75 = vmax.f32 %v51, -20.0
    %v76 = vmin.f32 %v75, 20.0
    %77 = vst [vmem:[#allocation5 + $0x5] sm:$0x1] %v76
    // Predicated region
    $region14: #{tpu_custom_call.1} parent=1 // pred_check
      _
    $region15: #{tpu_custom_call.1} parent=1 // pred_check_branch
      %79 = sbr.rel (0) target = $region17
    $region16: #{tpu_custom_call.1} parent=1 // pred_region
      %81 = vsyncadd [#allocation4], 0
      %s83 = sshll.u32 [#allocation5], 4
      %s84 = int_to_ptr.vmem [resolvable:$true] %s83
      %s85 = sshll.u32 %s2, 4
      %s86 = int_to_ptr.hbm [resolvable:$true] %s85
      %88 = dma.vmem_to_hbm [thread:$0]  %s84, 128, %s86, [#allocation4]
    $region17: #{tpu_custom_call.1} parent=1 // pred_fallthru
      _
    // Predicated region
    $region18: #{tpu_custom_call.1} parent=1 // pred_check
      _
    $region19: #{tpu_custom_call.1} parent=1 // pred_check_branch
      %90 = sbr.rel (0) target = $region21
    $region20: #{tpu_custom_call.1} parent=1 // pred_region
      %92 = dma.done [#allocation4], 128
    $region21: #{tpu_custom_call.1} parent=1 // pred_fallthru
      _
    %93 = vsyncpa [#allocation3], 1
    %94 = vsyncpa [#allocation4], 1

</llo_original>
